<compile_context>
chip_gen: v5e
topology: v5e:2x2
jax: 0.10.0
libtpu: 0.0.40
codegen_flags: <defaults>
</compile_context>

<pallas_src>
import jax
import jax.numpy as jnp
from jax.experimental import pallas as pl
from jax.experimental.pallas import tpu as pltpu

EPS = 1e-5


# ----------------------------------------------------------------------------
# Fused single-pass kernel: whole sample resident in VMEM.
# ----------------------------------------------------------------------------
def _fused_kernel(p_ref, q_ref, x_ref, o_ref):
    # x_ref: (1, C, HW)  -- one full sample, lane axis = HW.
    x = x_ref[0].astype(jnp.float32)                      # (C, HW)
    cnt = jnp.float32(x.shape[0] * x.shape[1])
    s = jnp.sum(x)
    sq = jnp.sum(x * x)
    mean = s / cnt
    var = sq / cnt - mean * mean                          # one-pass variance
    inv = jax.lax.rsqrt(var + EPS)

    a = p_ref[0].astype(jnp.float32) * inv                # (C, 1)
    b = q_ref[0].astype(jnp.float32) - mean * a           # (C, 1)
    o_ref[0] = (x * a + b).astype(o_ref.dtype)


# ----------------------------------------------------------------------------
# Fallback two-pass kernels (large samples that don't fit VMEM).
# ----------------------------------------------------------------------------
def _stats_kernel(x_ref, sum_ref, sq_ref):
    # x_ref: (1, C, HWT) tile of one sample.  Sum / sum-of-squares accumulated
    # in f32 into (1, 1, 1) blocks resident across the "arbitrary" HW axis.
    t = pl.program_id(1)

    @pl.when(t == 0)
    def _():
        sum_ref[...] = jnp.zeros_like(sum_ref)
        sq_ref[...] = jnp.zeros_like(sq_ref)

    x = x_ref[0].astype(jnp.float32)                      # (C, HWT)
    sum_ref[...] += jnp.sum(x)
    sq_ref[...] += jnp.sum(x * x)


def _apply_kernel(a_ref, b_ref, x_ref, o_ref):
    # Folded norm+affine+modulation: out = x * A + B; A/B are per-channel
    # (C, 1) f32 columns broadcast over the lane (H*W) axis.
    a = a_ref[0]                                          # (C, 1) f32
    b = b_ref[0]                                          # (C, 1) f32
    o_ref[0] = (x_ref[0].astype(jnp.float32) * a + b).astype(o_ref.dtype)


def _choose_hw_tile(hw, c, itemsize, target_bytes=2 << 20):
    """Largest lane-dense (multiple-of-128) HW tile that divides HW and keeps
    a (C, tile) block within ~target_bytes."""
    if hw % 128 != 0:
        return hw                                         # full rows fallback
    for cand in (4096, 2048, 1024, 512, 256, 128):
        if hw % cand == 0 and c * cand * itemsize <= target_bytes:
            return cand
    return 128


# ----------------------------------------------------------------------------
# Forward
# ----------------------------------------------------------------------------
def adaln_forward(x_nchw, cond, params, skip=False):
    """x_nchw: (N, C, H, W); cond: (N, Cc, 1, 1)."""
    if skip:
        return x_nchw

    N, C, H, W = x_nchw.shape
    Cc = cond.shape[1]
    HW = H * W

    # (N, C, HW): plain reshape, no transpose; H*W on the lane axis.
    x = x_nchw.reshape(N, C, HW)

    # ---- tiny per-sample math in XLA: 1x1-conv projections + pre-fold ------
    cond2 = cond.reshape(N, Cc).astype(jnp.float32)
    w1 = params["proj1_w"].reshape(C, Cc).astype(jnp.float32)
    w2 = params["proj2_w"].reshape(C, Cc).astype(jnp.float32)
    w = cond2 @ w1.T + params["proj1_b"].reshape(1, C).astype(jnp.float32)
    b = cond2 @ w2.T + params["proj2_b"].reshape(1, C).astype(jnp.float32)

    gw = params["gn_w"].reshape(1, C).astype(jnp.float32)
    gb = params["gn_b"].reshape(1, C).astype(jnp.float32)

    # out = ((x - mean) * inv * gw + gb) * w + b
    #     = x * (inv * P) + (Q - mean * inv * P),  P = gw*w,  Q = gb*w + b
    P = (gw * w).reshape(N, C, 1)                          # (N, C, 1) f32
    Q = (gb * w + b).reshape(N, C, 1)                      # (N, C, 1) f32

    sample_bytes = C * HW * x.dtype.itemsize
    sample_f32_bytes = C * HW * 4

    # ---- fused single-pass path: whole sample resident in VMEM -------------
    if sample_f32_bytes <= (2 << 20):
        vmem_limit = int(min(32 << 20,
                             max(16 << 20,
                                 4 * sample_bytes + 2 * sample_f32_bytes
                                 + (4 << 20))))
        out = pl.pallas_call(
            _fused_kernel,
            out_shape=jax.ShapeDtypeStruct((N, C, HW), x.dtype),
            grid_spec=pltpu.PrefetchScalarGridSpec(
                num_scalar_prefetch=0,
                grid=(N,),
                in_specs=[
                    pl.BlockSpec((1, C, 1), lambda n: (n, 0, 0)),    # P
                    pl.BlockSpec((1, C, 1), lambda n: (n, 0, 0)),    # Q
                    pl.BlockSpec((1, C, HW), lambda n: (n, 0, 0)),   # x
                ],
                out_specs=pl.BlockSpec((1, C, HW), lambda n: (n, 0, 0)),
            ),
            compiler_params=pltpu.CompilerParams(
                dimension_semantics=("parallel",),
                vmem_limit_bytes=vmem_limit),
        )(P, Q, x)
        return out.reshape(N, C, H, W)

    # ---- fallback two-pass path (sample too large for VMEM) ----------------
    hw_t = _choose_hw_tile(HW, C, x.dtype.itemsize)
    n_tiles = HW // hw_t
    block_bytes = C * hw_t * x.dtype.itemsize
    vmem_limit = int(min(48 << 20, max(16 << 20, 8 * block_bytes + (4 << 20))))

    # pass 1: per-sample sum / sum-of-squares (tiled reduction)
    s, sq = pl.pallas_call(
        _stats_kernel,
        out_shape=(jax.ShapeDtypeStruct((N, 1, 1), jnp.float32),
                   jax.ShapeDtypeStruct((N, 1, 1), jnp.float32)),
        grid_spec=pltpu.PrefetchScalarGridSpec(
            num_scalar_prefetch=0,
            grid=(N, n_tiles),
            in_specs=[pl.BlockSpec((1, C, hw_t), lambda n, t: (n, 0, t))],
            out_specs=(pl.BlockSpec((1, 1, 1), lambda n, t: (n, 0, 0)),
                       pl.BlockSpec((1, 1, 1), lambda n, t: (n, 0, 0))),
        ),
        compiler_params=pltpu.CompilerParams(
            dimension_semantics=("parallel", "arbitrary"),
            vmem_limit_bytes=vmem_limit),
    )(x)

    cnt = jnp.float32(C * HW)
    mean = s.reshape(N, 1) / cnt                           # (N, 1)
    var = sq.reshape(N, 1) / cnt - mean * mean
    inv = jax.lax.rsqrt(var + EPS)                         # (N, 1)

    A = (inv * P.reshape(N, C)).reshape(N, C, 1)           # (N, C, 1) f32
    B = (Q.reshape(N, C) - mean * (inv * P.reshape(N, C))).reshape(N, C, 1)

    # pass 2: fully parallel, lane-dense elementwise apply
    out = pl.pallas_call(
        _apply_kernel,
        out_shape=jax.ShapeDtypeStruct((N, C, HW), x.dtype),
        grid_spec=pltpu.PrefetchScalarGridSpec(
            num_scalar_prefetch=0,
            grid=(N, n_tiles),
            in_specs=[
                pl.BlockSpec((1, C, 1), lambda n, t: (n, 0, 0)),     # A
                pl.BlockSpec((1, C, 1), lambda n, t: (n, 0, 0)),     # B
                pl.BlockSpec((1, C, hw_t), lambda n, t: (n, 0, t)),  # x tile
            ],
            out_specs=pl.BlockSpec((1, C, hw_t), lambda n, t: (n, 0, t)),
        ),
        compiler_params=pltpu.CompilerParams(
            dimension_semantics=("parallel", "parallel"),
            vmem_limit_bytes=vmem_limit),
    )(A, B, x)

    return out.reshape(N, C, H, W)


# ----------------------------------------------------------------------------
# Pure-JAX reference mirroring the PyTorch forward.
# ----------------------------------------------------------------------------
def adaln_reference(x_nchw, cond, params, skip=False):
    if skip:
        return x_nchw
    N, C, H, W = x_nchw.shape
    Cc = cond.shape[1]
    w = jnp.einsum("nchw,oc->nohw", cond, params["proj1_w"].reshape(C, Cc)) \
        + params["proj1_b"].reshape(1, C, 1, 1)
    b = jnp.einsum("nchw,oc->nohw", cond, params["proj2_w"].reshape(C, Cc)) \
        + params["proj2_b"].reshape(1, C, 1, 1)
    mean = jnp.mean(x_nchw, axis=(1, 2, 3), keepdims=True)
    var = jnp.mean((x_nchw - mean) ** 2, axis=(1, 2, 3), keepdims=True)
    normed = (x_nchw - mean) * jax.lax.rsqrt(var + EPS)
    normed = normed * params["gn_w"].reshape(1, C, 1, 1) \
        + params["gn_b"].reshape(1, C, 1, 1)
    return normed * w + b


if __name__ == "__main__":
    N, C, H, W = 2, 4, 16, 16          # input: (N, channels, H, W)
    Cc = 8                             # conditionC; condition: (N, Cc, 1, 1)

    key = jax.random.PRNGKey(0)
    kx, kc, k1, k2, k3, k4, k5, k6 = jax.random.split(key, 8)

    x = jax.random.normal(kx, (N, C, H, W), dtype=jnp.float32)
    cond = jax.random.normal(kc, (N, Cc, 1, 1), dtype=jnp.float32)

    params = {
        # Conv2d(conditionC, channels, 1): weight (C, Cc, 1, 1), bias (C,)
        "proj1_w": 0.1 * jax.random.normal(k1, (C, Cc, 1, 1), dtype=jnp.float32),
        "proj1_b": 0.1 * jax.random.normal(k2, (C,), dtype=jnp.float32),
        "proj2_w": 0.1 * jax.random.normal(k3, (C, Cc, 1, 1), dtype=jnp.float32),
        "proj2_b": 0.1 * jax.random.normal(k4, (C,), dtype=jnp.float32),
        # GroupNorm(1, channels) affine params (randomized to exercise path).
        "gn_w": 1.0 + 0.1 * jax.random.normal(k5, (C,), dtype=jnp.float32),
        "gn_b": 0.1 * jax.random.normal(k6, (C,), dtype=jnp.float32),
    }

    out = adaln_forward(x, cond, params, skip=False)
    out = jax.block_until_ready(out)

    ref = adaln_reference(x, cond, params, skip=False)
    assert out.shape == (N, C, H, W)
    assert jnp.allclose(out, ref, atol=1e-4, rtol=1e-4), "mismatch vs reference"

    print("KERNEL_OK")
</pallas_src>

<mosaic_0001>
module attributes {stable_mosaic.version = 11 : i64} {
  func.func @_fused_kernel(%arg0: i32, %arg1: memref<1x4x1xf32, #tpu.memory_space<vmem>>, %arg2: memref<1x4x1xf32, #tpu.memory_space<vmem>>, %arg3: memref<1x4x256xf32, #tpu.memory_space<vmem>>, %arg4: memref<1x4x256xf32, #tpu.memory_space<vmem>>) attributes {dimension_semantics = [#tpu.dimension_semantics<parallel>], iteration_bounds = array<i64: 2>, scalar_prefetch = 0 : i64, scratch_operands = 0 : i64, tpu.core_type = #tpu.core_type<tc>, window_params = [{transform_indices = @transform_0, window_bounds = array<i64: 1, 4, 1>}, {transform_indices = @transform_1, window_bounds = array<i64: 1, 4, 1>}, {transform_indices = @transform_2, window_bounds = array<i64: 1, 4, 256>}, {transform_indices = @transform_3, window_bounds = array<i64: 1, 4, 256>}]} {
    %c0 = arith.constant 0 : index
    %c0_0 = arith.constant 0 : index
    %c0_1 = arith.constant 0 : index
    %0 = vector.load %arg3[%c0, %c0_0, %c0_1] : memref<1x4x256xf32, #tpu.memory_space<vmem>>, vector<1x4x256xf32>
    %1 = vector.shape_cast %0 : vector<1x4x256xf32> to vector<4x256xf32>
    %2 = vector.shape_cast %1 : vector<4x256xf32> to vector<1x4x256xf32>
    %cst = arith.constant dense<0.000000e+00> : vector<1xf32>
    %3 = vector.multi_reduction <add>, %2, %cst [1, 2] : vector<1x4x256xf32> to vector<1xf32>
    %4 = vector.shape_cast %3 : vector<1xf32> to vector<1x1x1xf32>
    %5 = vector.extract %4[0, 0, 0] : f32 from vector<1x1x1xf32>
    %6 = arith.mulf %1, %1 : vector<4x256xf32>
    %7 = vector.shape_cast %6 : vector<4x256xf32> to vector<1x4x256xf32>
    %cst_2 = arith.constant dense<0.000000e+00> : vector<1xf32>
    %8 = vector.multi_reduction <add>, %7, %cst_2 [1, 2] : vector<1x4x256xf32> to vector<1xf32>
    %9 = vector.shape_cast %8 : vector<1xf32> to vector<1x1x1xf32>
    %10 = vector.extract %9[0, 0, 0] : f32 from vector<1x1x1xf32>
    %cst_3 = arith.constant 1.024000e+03 : f32
    %11 = arith.divf %5, %cst_3 : f32
    %cst_4 = arith.constant 1.024000e+03 : f32
    %12 = arith.divf %10, %cst_4 : f32
    %13 = arith.mulf %11, %11 : f32
    %14 = arith.subf %12, %13 : f32
    %cst_5 = arith.constant 9.99999974E-6 : f32
    %15 = arith.addf %14, %cst_5 : f32
    %16 = math.rsqrt %15 : f32
    %c0_6 = arith.constant 0 : index
    %c0_7 = arith.constant 0 : index
    %c0_8 = arith.constant 0 : index
    %17 = vector.load %arg1[%c0_6, %c0_7, %c0_8] : memref<1x4x1xf32, #tpu.memory_space<vmem>>, vector<1x4x1xf32>
    %18 = vector.shape_cast %17 : vector<1x4x1xf32> to vector<4x1xf32>
    %19 = vector.broadcast %16 : f32 to vector<4x1xf32>
    %20 = arith.mulf %18, %19 : vector<4x1xf32>
    %c0_9 = arith.constant 0 : index
    %c0_10 = arith.constant 0 : index
    %c0_11 = arith.constant 0 : index
    %21 = vector.load %arg2[%c0_9, %c0_10, %c0_11] : memref<1x4x1xf32, #tpu.memory_space<vmem>>, vector<1x4x1xf32>
    %22 = vector.shape_cast %21 : vector<1x4x1xf32> to vector<4x1xf32>
    %23 = vector.broadcast %11 : f32 to vector<4x1xf32>
    %24 = arith.mulf %23, %20 : vector<4x1xf32>
    %25 = arith.subf %22, %24 : vector<4x1xf32>
    %26 = vector.broadcast %20 : vector<4x1xf32> to vector<4x256xf32>
    %27 = arith.mulf %1, %26 : vector<4x256xf32>
    %28 = vector.broadcast %25 : vector<4x1xf32> to vector<4x256xf32>
    %29 = arith.addf %27, %28 : vector<4x256xf32>
    %c0_12 = arith.constant 0 : index
    %c0_13 = arith.constant 0 : index
    %c0_14 = arith.constant 0 : index
    %30 = vector.load %arg4[%c0_12, %c0_13, %c0_14] : memref<1x4x256xf32, #tpu.memory_space<vmem>>, vector<1x4x256xf32>
    %31 = vector.shape_cast %30 : vector<1x4x256xf32> to vector<4x256xf32>
    %32 = vector.shape_cast %29 : vector<4x256xf32> to vector<1x4x256xf32>
    tpu.vector_store %arg4[%c0_12, %c0_13, %c0_14], %32 {strides = array<i32>} : memref<1x4x256xf32, #tpu.memory_space<vmem>>, vector<1x4x256xf32>,
    return
  }
  func.func @transform_0(%arg0: i32) -> (i32, i32, i32) {
    %c0_i32 = arith.constant 0 : i32
    %c0_i32_0 = arith.constant 0 : i32
    %c0_i32_1 = arith.constant 0 : i32
    return %arg0, %c0_i32, %c0_i32_0 : i32, i32, i32
  }
  func.func @transform_1(%arg0: i32) -> (i32, i32, i32) {
    %c0_i32 = arith.constant 0 : i32
    %c0_i32_0 = arith.constant 0 : i32
    %c0_i32_1 = arith.constant 0 : i32
    return %arg0, %c0_i32, %c0_i32_0 : i32, i32, i32
  }
  func.func @transform_2(%arg0: i32) -> (i32, i32, i32) {
    %c0_i32 = arith.constant 0 : i32
    %c0_i32_0 = arith.constant 0 : i32
    %c0_i32_1 = arith.constant 0 : i32
    return %arg0, %c0_i32, %c0_i32_0 : i32, i32, i32
  }
  func.func @transform_3(%arg0: i32) -> (i32, i32, i32) {
    %c0_i32 = arith.constant 0 : i32
    %c0_i32_0 = arith.constant 0 : i32
    %c0_i32_1 = arith.constant 0 : i32
    return %arg0, %c0_i32, %c0_i32_0 : i32, i32, i32
  }
}

</mosaic_0001>

<llo_original>
// kernel: tpu_custom_call.1
$region0: #{tpu_custom_call.1}
  #allocation0 [shape = 'u32[]', space=smem, size = 0x4, offset = 0x4, fixed_abs, tag = 'smem constant byte address 0x4 - core index']
  #allocation1 [shape = 'u32[72,128]{1,0:T(1,128)}', space=vmem, size = 0x9000, scoped, tag = 'internal scratch']
  %s0 = inlined_call_operand.vmem [shape: f32[2,4,1], index: 0, kind: input, shape index: {}]
  %s1 = inlined_call_operand.vmem [shape: f32[2,4,1], index: 1, kind: input, shape index: {}]
  %s2 = inlined_call_operand.vmem [shape: f32[2,4,256], index: 2, kind: input, shape index: {}]
  %s3 = inlined_call_operand.hbm [shape: f32[2,4,256], index: 3, kind: output, shape index: {}]
  %s4 = sld [smem:[#allocation0]]
  $region45: #{tpu_custom_call.1} parent=0
    _
  %s6 = ssub.s32 1, %s4
  %s7 = scalar_select 0, %s6, %s4
  $region1: #{tpu_custom_call.1} parent=0
    #allocation2 [shape = 'u8[8192]{0}', space=vmem, size = 0x2000, scoped, tag = 'output window, operand 0']
    #allocation3 [shape = 's32[2]{0}', space=sflag, size = 0x8, scoped, tag = 'scoped memory for tpu_custom_call.1']
    %8 = vsyncpa [#allocation3], 0
    %s9 = scalar_lea.sflag [#allocation3], 1
    %10 = vsyncpa %s9, 0
    loop: start=0, step=1, limit=4
    $region2: #{tpu_custom_call.1} parent=1 // loop_pre_header
      _
    $region3: #{tpu_custom_call.1} parent=1 // loop_header
      %s12 = sphi 0, %s16
      %p13 = scmp.ge.s32.totalorder %s12, 4
      %s22 = sphi 0, %s24
      %s25 = sphi 0, %s22
      %s26 = sphi 0, %s25
      %s42 = sphi 0, %s26
      %s48 = sphi 0, %s50
      %s51 = sphi 0, %s48
      %s52 = sphi 0, %s51
      %s68 = sphi 0, %s52
      %s74 = sphi 0, %s76
      %s77 = sphi 0, %s74
      %s78 = sphi 0, %s77
      %s94 = sphi 0, %s78
      %s100 = sphi 0, %s102
      %s103 = sphi 0, %s100
      %s104 = sphi 0, %s103
      %s120 = sphi 0, %s104
    $region4: #{tpu_custom_call.1} parent=1 // loop_header_branch
      %15 = sbr.rel (%p13) target = $region8
    $region5: #{tpu_custom_call.1} parent=1 // loop_body
      %s17 = ssub.s32 %s12, 1
      %s18 = ssub.s32 %s12, 2
      %s19 = sadd.s32 %s12, 1
      %s20 = ssub.s32 %s12, %s19
      %p21 = scmp.eq.s32.totalorder %s20, 0
      %s23 = sadd.s32 %s22, 1
      %s24 = scalar_select %p21, %s22, %s23
      %p27 = pneg %p21
      %p28 = scmp.eq.s32.totalorder %s12, 1
      %p29 = por %p27, %p28
      %p30 = scmp.ne.s32.totalorder %s22, %s25
      %p31 = scmp.eq.s32.totalorder %s12, 0
      %p32 = por %p30, %p31
      %p33 = scmp.ne.s32.totalorder %s22, %s25
      %p34 = scmp.eq.s32.totalorder %s17, 1
      %p35 = por %p33, %p34
      %p36 = scmp.ne.s32.totalorder %s25, %s26
      %p37 = scmp.eq.s32.totalorder %s17, 0
      %p38 = por %p36, %p37
      %p39 = scmp.ne.s32.totalorder %s25, %s26
      %p40 = scmp.eq.s32.totalorder %s18, 1
      %p41 = por %p39, %p40
      %p43 = scmp.ne.s32.totalorder %s26, %s42
      %p44 = scmp.eq.s32.totalorder %s18, 0
      %p45 = por %p43, %p44
      %s46 = ssub.s32 %s12, %s19
      %p47 = scmp.eq.s32.totalorder %s46, 0
      %s49 = sadd.s32 %s48, 1
      %s50 = scalar_select %p47, %s48, %s49
      %p53 = pneg %p47
      %p54 = scmp.eq.s32.totalorder %s12, 1
      %p55 = por %p53, %p54
      %p56 = scmp.ne.s32.totalorder %s48, %s51
      %p57 = scmp.eq.s32.totalorder %s12, 0
      %p58 = por %p56, %p57
      %p59 = scmp.ne.s32.totalorder %s48, %s51
      %p60 = scmp.eq.s32.totalorder %s17, 1
      %p61 = por %p59, %p60
      %p62 = scmp.ne.s32.totalorder %s51, %s52
      %p63 = scmp.eq.s32.totalorder %s17, 0
      %p64 = por %p62, %p63
      %p65 = scmp.ne.s32.totalorder %s51, %s52
      %p66 = scmp.eq.s32.totalorder %s18, 1
      %p67 = por %p65, %p66
      %p69 = scmp.ne.s32.totalorder %s52, %s68
      %p70 = scmp.eq.s32.totalorder %s18, 0
      %p71 = por %p69, %p70
      %s72 = ssub.s32 %s12, %s19
      %p73 = scmp.eq.s32.totalorder %s72, 0
      %s75 = sadd.s32 %s74, 1
      %s76 = scalar_select %p73, %s74, %s75
      %p79 = pneg %p73
      %p80 = scmp.eq.s32.totalorder %s12, 1
      %p81 = por %p79, %p80
      %p82 = scmp.ne.s32.totalorder %s74, %s77
      %p83 = scmp.eq.s32.totalorder %s12, 0
      %p84 = por %p82, %p83
      %p85 = scmp.ne.s32.totalorder %s74, %s77
      %p86 = scmp.eq.s32.totalorder %s17, 1
      %p87 = por %p85, %p86
      %p88 = scmp.ne.s32.totalorder %s77, %s78
      %p89 = scmp.eq.s32.totalorder %s17, 0
      %p90 = por %p88, %p89
      %p91 = scmp.ne.s32.totalorder %s77, %s78
      %p92 = scmp.eq.s32.totalorder %s18, 1
      %p93 = por %p91, %p92
      %p95 = scmp.ne.s32.totalorder %s78, %s94
      %p96 = scmp.eq.s32.totalorder %s18, 0
      %p97 = por %p95, %p96
      %s98 = ssub.s32 %s12, %s19
      %p99 = scmp.eq.s32.totalorder %s98, 0
      %s101 = sadd.s32 %s100, 1
      %s102 = scalar_select %p99, %s100, %s101
      %p105 = pneg %p99
      %p106 = scmp.eq.s32.totalorder %s12, 1
      %p107 = por %p105, %p106
      %p108 = scmp.ne.s32.totalorder %s100, %s103
      %p109 = scmp.eq.s32.totalorder %s12, 0
      %p110 = por %p108, %p109
      %p111 = scmp.ne.s32.totalorder %s100, %s103
      %p112 = scmp.eq.s32.totalorder %s17, 1
      %p113 = por %p111, %p112
      %p114 = scmp.ne.s32.totalorder %s103, %s104
      %p115 = scmp.eq.s32.totalorder %s17, 0
      %p116 = por %p114, %p115
      %p117 = scmp.ne.s32.totalorder %s103, %s104
      %p118 = scmp.eq.s32.totalorder %s18, 1
      %p119 = por %p117, %p118
      %p121 = scmp.ne.s32.totalorder %s104, %s120
      %p122 = scmp.eq.s32.totalorder %s18, 0
      %p123 = por %p121, %p122
      %p124 = scmp.le.s32.totalorder 1, %s12
      %p125 = scmp.lt.s32.totalorder %s12, 3
      %p126 = pnand %p124, %p125
      %p127 = pneg %p126
      // Predicated region
      $region9: #{tpu_custom_call.1} parent=5 // pred_check
        _
      $region10: #{tpu_custom_call.1} parent=5 // pred_check_branch
        %129 = sbr.rel (%p126) target = $region12
      $region11: #{tpu_custom_call.1} parent=5 // pred_region
        %s130 = ssub.s32 %s12, 1
      $region12: #{tpu_custom_call.1} parent=5 // pred_fallthru
        _
      %p131 = scmp.lt.s32.totalorder %s12, 2
      // Predicated region
      $region13: #{tpu_custom_call.1} parent=5 // pred_check
        %p132 = pneg %p131
      $region14: #{tpu_custom_call.1} parent=5 // pred_check_branch
        %134 = sbr.rel (%p132) target = $region16
      $region15: #{tpu_custom_call.1} parent=5 // pred_region
        // Predicated region
        $region17: #{tpu_custom_call.1} parent=15 // pred_check
          %p135 = pneg %p32
        $region18: #{tpu_custom_call.1} parent=15 // pred_check_branch
          %137 = sbr.rel (%p135) target = $region20
        $region19: #{tpu_custom_call.1} parent=15 // pred_region
          %p138 = scmp.lt.s32.totalorder %s12, 1
          %s139 = scalar_select %p138, %s12, 1
          %s140 = smul.addr %s139, 4
          %s141 = scalar_lea.vmem %s0, %s140
        $region20: #{tpu_custom_call.1} parent=15 // pred_fallthru
          _
        // Predicated region
        $region21: #{tpu_custom_call.1} parent=15 // pred_check
          %p142 = pneg %p58
        $region22: #{tpu_custom_call.1} parent=15 // pred_check_branch
          %144 = sbr.rel (%p142) target = $region24
        $region23: #{tpu_custom_call.1} parent=15 // pred_region
          %p145 = scmp.lt.s32.totalorder %s12, 1
          %s146 = scalar_select %p145, %s12, 1
          %s147 = smul.addr %s146, 4
          %s148 = scalar_lea.vmem %s1, %s147
        $region24: #{tpu_custom_call.1} parent=15 // pred_fallthru
          _
        // Predicated region
        $region25: #{tpu_custom_call.1} parent=15 // pred_check
          %p149 = pneg %p84
        $region26: #{tpu_custom_call.1} parent=15 // pred_check_branch
          %151 = sbr.rel (%p149) target = $region28
        $region27: #{tpu_custom_call.1} parent=15 // pred_region
          %p152 = scmp.lt.s32.totalorder %s12, 1
          %s153 = scalar_select %p152, %s12, 1
          %s154 = smul.addr %s153, 2
          %s155 = smul.addr %s154, 4
          %s156 = scalar_lea.vmem %s2, %s155
        $region28: #{tpu_custom_call.1} parent=15 // pred_fallthru
          _
      $region16: #{tpu_custom_call.1} parent=5 // pred_fallthru
        _
      %p157 = scmp.le.s32.totalorder 1, %s12
      %p158 = scmp.lt.s32.totalorder %s12, 3
      %p159 = pnand %p157, %p158
      %p160 = pneg %p159
      // Predicated region
      $region29: #{tpu_custom_call.1} parent=5 // pred_check
        _
      $region30: #{tpu_custom_call.1} parent=5 // pred_check_branch
        %162 = sbr.rel (%p159) target = $region32
      $region31: #{tpu_custom_call.1} parent=5 // pred_region
        %s163 = ssub.s32 %s12, 1
        %p164 = scmp.lt.s32.totalorder %s17, 1
        %s165 = scalar_select %p164, %s17, 1
        %s166 = smul.addr %s165, 4
        %s167 = scalar_lea.vmem %s0, %s166
        %p168 = pneg %p38
        %p169 = pneg %p35
        %p170 = scmp.lt.s32.totalorder %s17, 1
        %s171 = scalar_select %p170, %s17, 1
        %s172 = smul.addr %s171, 4
        %s173 = scalar_lea.vmem %s1, %s172
        %p174 = pneg %p64
        %p175 = pneg %p61
        %p176 = scmp.lt.s32.totalorder %s17, 1
        %s177 = scalar_select %p176, %s17, 1
        %s178 = smul.addr %s177, 2
        %s179 = smul.addr %s178, 4
        %s180 = scalar_lea.vmem %s2, %s179
        %p181 = pneg %p90
        %p182 = pneg %p87
        %p183 = pneg %p116
        %p184 = pneg %p113
        %s185 = sand.u32 %s103, 1
        %s186 = scalar_lea.sflag [#allocation3], %s185
        %s187 = sand.u32 %s103, 1
        %s188 = smul.addr %s187, 8
        %s189 = scalar_lea.vmem [#allocation2], %s188
        %p190 = scmp.lt.s32.totalorder %s17, 1
        %s191 = scalar_select %p190, %s17, 1
        %s192 = smul.addr %s191, 4
        %s193 = scalar_lea.vmem %s0, %s192
        %p194 = scmp.lt.s32.totalorder %s17, 1
        %s195 = scalar_select %p194, %s17, 1
        %s196 = smul.addr %s195, 4
        %s197 = scalar_lea.vmem %s1, %s196
        %p198 = scmp.lt.s32.totalorder %s17, 1
        %s199 = scalar_select %p198, %s17, 1
        %s200 = smul.addr %s199, 2
        %s201 = smul.addr %s200, 4
        %s202 = scalar_lea.vmem %s2, %s201
        %v203 = vld [vmem:[%s202] sm:$0xff]
        %205 = vst [vmem:[#allocation1] ss:$2 sm:$0xff] %v203
        %v206 = vld.sshfl [vmem:[#allocation1] sm:$0xff pattern:$0x75316420]
        %v207 = vld.sshfl [vmem:[#allocation1 + $0x8] sm:$0xff pattern:$0x75316420]
        %vm210 = vcmask 1043456
        %v211 = vsel %vm210, %v206, 0.0
        %v212 = vsel %vm210, %v207, 0.0
        %v213 = vadd.f32 %v211, %v212
        %214 = vadd.xlane.f32.xlu0 %v213
        %v215 = vpop.xlane.xlu0 %214
        %v216 = vrot.slane %v215, 4
        %v217 = vadd.f32 %v215, %v216
        %v218 = vrot.slane %v217, 2
        %v219 = vadd.f32 %v217, %v218
        %v220 = vrot.slane %v219, 1
        %v221 = vadd.f32 %v219, %v220
        %s222 = vtos %v221
        %v223 = vmul.f32 %v203, %v203
        %225 = vst [vmem:[#allocation1] ss:$2 sm:$0xff] %v223
        %v226 = vld.sshfl [vmem:[#allocation1] sm:$0xff pattern:$0x75316420]
        %v227 = vld.sshfl [vmem:[#allocation1 + $0x8] sm:$0xff pattern:$0x75316420]
        %v230 = vsel %vm210, %v226, 0.0
        %v231 = vsel %vm210, %v227, 0.0
        %v232 = vadd.f32 %v230, %v231
        %233 = vadd.xlane.f32.xlu0 %v232
        %v234 = vpop.xlane.xlu0 %233
        %v235 = vrot.slane %v234, 4
        %v236 = vadd.f32 %v234, %v235
        %v237 = vrot.slane %v236, 2
        %v238 = vadd.f32 %v236, %v237
        %v239 = vrot.slane %v238, 1
        %v240 = vadd.f32 %v238, %v239
        %s241 = vtos %v240
        %v242 = vrcp.pop 1024.0
        %v243 = vmul.f32 1024.0, %v242
        %v244 = vsub.f32 1.0, %v243
        %v245 = vmul.f32 %v242, %v244
        %v246 = vadd.f32 %v242, %v245
        %vm247 = vweird.f32 %v242
        %v248 = vsel %vm247, %v242, %v246
        %s249 = vtos %v248
        %s250 = smul.f32 %s222, %s249
        %v251 = vrcp.pop 1024.0
        %v252 = vmul.f32 1024.0, %v251
        %v253 = vsub.f32 1.0, %v252
        %v254 = vmul.f32 %v251, %v253
        %v255 = vadd.f32 %v251, %v254
        %vm256 = vweird.f32 %v251
        %v257 = vsel %vm256, %v251, %v255
        %s258 = vtos %v257
        %s259 = smul.f32 %s241, %s258
        %s260 = smul.f32 %s250, %s250
        %s261 = ssub.f32 %s259, %s260
        %s262 = sadd.f32 %s261, 1e-05
        %v263 = vstv %s262
        %v264 = vrsqrt.pop %v263
        %v265 = vmul.f32 %v264, %v263
        %v266 = vmul.f32 %v265, %v264
        %v267 = vmul.f32 0.5, %v266
        %v268 = vsub.f32 1.5, %v267
        %v269 = vmul.f32 %v264, %v268
        %vm270 = vweird.f32 %v263
        %vm271 = vweird.f32 %v264
        %vm272 = vmor %vm270, %vm271
        %v273 = vsel %vm272, %v264, %v269
        %s274 = vtos %v273
        %v275 = vld [vmem:[%s193] sm:$0xf]
        %v276 = vstv %s274
        %v277 = vmul.f32 %v275, %v276
        %v278 = vld [vmem:[%s197] sm:$0xf]
        %v279 = vstv %s250
        %v280 = vmul.f32 %v279, %v277
        %v281 = vsub.f32 %v278, %v280
        %283 = vset.pattern.permute.xlu0 0
        %284 = vperm.xlu0 %283, %v277
        %v285 = vpop.permute.xlu0 %284
        %v287 = vunpack.c.l.s4 839922192
        %v288 = vunpack.c.0.s8 %v287
        %v289 = vperm.slane %v285, %v288
        %v291 = vmul.f32 %v203, %v289
        %293 = vset.pattern.permute.xlu0 0
        %294 = vperm.xlu0 %293, %v281
        %v295 = vpop.permute.xlu0 %294
        %v297 = vunpack.c.l.s4 839922192
        %v298 = vunpack.c.0.s8 %v297
        %v299 = vperm.slane %v295, %v298
        %v301 = vadd.f32 %v291, %v299
        %302 = vst [vmem:[%s189] sm:$0xff] %v301
        %s303 = sand.u32 %s103, 1
        %s304 = scalar_lea.sflag [#allocation3], %s303
        %s305 = sand.u32 %s103, 1
        %s306 = smul.addr %s305, 8
        %s307 = scalar_lea.vmem [#allocation2], %s306
        // Predicated region
        $region33: #{tpu_custom_call.1} parent=31 // pred_check
          %p308 = pneg %p113
        $region34: #{tpu_custom_call.1} parent=31 // pred_check_branch
          %310 = sbr.rel (%p308) target = $region36
        $region35: #{tpu_custom_call.1} parent=31 // pred_region
          %312 = vsyncadd %s304, 0
          %s313 = smul.addr %s17, 2
          %s314 = smul.addr %s313, 4
          %s315 = scalar_lea.hbm %s3, %s314
          %s317 = sshll.u32 %s307, 4
          %s318 = int_to_ptr.vmem [resolvable:$true] %s317
          %s319 = sshll.u32 %s315, 4
          %s320 = int_to_ptr.hbm [resolvable:$true] %s319
          %322 = dma.vmem_to_hbm [thread:$0]  %s318, 128, %s320, %s304
        $region36: #{tpu_custom_call.1} parent=31 // pred_fallthru
          _
      $region32: #{tpu_custom_call.1} parent=5 // pred_fallthru
        _
      %p323 = scmp.le.s32.totalorder 2, %s12
      // Predicated region
      $region37: #{tpu_custom_call.1} parent=5 // pred_check
        %p324 = pneg %p323
      $region38: #{tpu_custom_call.1} parent=5 // pred_check_branch
        %326 = sbr.rel (%p324) target = $region40
      $region39: #{tpu_custom_call.1} parent=5 // pred_region
        %s327 = ssub.s32 %s12, 2
        // Predicated region
        $region41: #{tpu_custom_call.1} parent=39 // pred_check
          %p328 = pneg %p119
        $region42: #{tpu_custom_call.1} parent=39 // pred_check_branch
          %330 = sbr.rel (%p328) target = $region44
        $region43: #{tpu_custom_call.1} parent=39 // pred_region
          %s331 = sand.u32 %s104, 1
          %s332 = scalar_lea.sflag [#allocation3], %s331
          %s333 = sand.u32 %s104, 1
          %s334 = smul.addr %s333, 8
          %s335 = scalar_lea.vmem [#allocation2], %s334
          %337 = dma.done %s332, 128
        $region44: #{tpu_custom_call.1} parent=39 // pred_fallthru
          _
      $region40: #{tpu_custom_call.1} parent=5 // pred_fallthru
        _
    $region6: #{tpu_custom_call.1} parent=1 // loop_footer
      %s16 = sadd.s32 1, %s12
    $region7: #{tpu_custom_call.1} parent=1 // loop_footer_branch
      %11 = sbr.rel target = $region3
    $region8: #{tpu_custom_call.1} parent=1 // loop_exit
      _
    %338 = vsyncpa [#allocation3], 1
    %s339 = scalar_lea.sflag [#allocation3], 1
    %340 = vsyncpa %s339, 1

</llo_original>
